<compile_context>
chip_gen: v5e
topology: v5e:2x2
jax: 0.10.0
libtpu: 0.0.40
codegen_flags: <defaults>
</compile_context>

<pallas_src>
import functools

import jax
import jax.numpy as jnp
from jax import lax
from jax.experimental import pallas as pl
from jax.experimental.pallas import tpu as pltpu


def fcnet_kernel(x_ref, w1_ref, b1_ref, w2_ref, b2_ref, w3_ref, b3_ref, o_ref,
                 *, compute_dtype):
    # x_ref : (block_b, z_dim)        -- natural (B, z_dim) layout, no wrapper transpose
    # w1_ref: (hidden, z_dim)         -- PyTorch (out, in) layout, compute_dtype
    # b1_ref: (hidden, 1)   f32
    # w2_ref: (hidden, hidden)        -- compute_dtype
    # b2_ref: (hidden, 1)   f32
    # w3_ref: (hidden, 1)   f32       -- column form for the VPU/XLU final layer
    # b3_ref: (1, 1)        f32 scalar in SMEM
    # o_ref : (1, block_b)            -- lane-dense output row
    x = x_ref[...]
    if x.dtype != compute_dtype:
        x = x.astype(compute_dtype)

    # input_layer + ReLU: contract z_dim of both operands so the result is
    # already (hidden, block_b) with batch on lanes (no in-kernel transpose).
    h = lax.dot_general(w1_ref[...], x,
                        dimension_numbers=(((1,), (1,)), ((), ())),
                        preferred_element_type=jnp.float32)
    h = jnp.maximum(h + b1_ref[...], 0.0)

    # hidden_1 + ReLU, applied TWICE with the same weights (as in the module).
    # TODO(synk): on v6e/v7x the bias-add/ReLU could stay in bf16; kept f32 so
    # the same kernel is safe on v5e (no bf16 VPU).
    h = jnp.dot(w2_ref[...], h.astype(compute_dtype),
                preferred_element_type=jnp.float32)
    h = jnp.maximum(h + b2_ref[...], 0.0)
    h = jnp.dot(w2_ref[...], h.astype(compute_dtype),
                preferred_element_type=jnp.float32)
    h = jnp.maximum(h + b2_ref[...], 0.0)

    # hidden_2 (hidden -> 1) + Sigmoid on VPU + XLU: broadcast-multiply by the
    # (hidden, 1) weight column and reduce over sublanes.  Avoids an M=1 MXU
    # matmul and an extra bf16 cast of h; result is lane-dense (1, block_b).
    logits = jnp.sum(w3_ref[...] * h, axis=0, keepdims=True) + b3_ref[0, 0]
    o_ref[...] = jax.nn.sigmoid(logits).astype(o_ref.dtype)


def _round_up(n, m):
    return ((n + m - 1) // m) * m


def fcnet_forward(x, params, *, block_b=2048, use_bf16=True):
    """x: (B, z_dim); params in PyTorch layout (W: (out, in), b: (out,))."""
    w1, b1, w2, b2, w3, b3 = params
    B, z_dim = x.shape
    hidden_dim = w1.shape[0]
    compute_dtype = jnp.bfloat16 if use_bf16 else jnp.float32

    # Block-size selection: large lane tiles amortize per-grid-step overhead,
    # but cap at ~half the batch (rounded to 128 lanes) so grid >= 2 whenever
    # possible, letting v7x shard the "parallel" axis across its 2 TCs.
    bb = min(block_b, _round_up(pl.cdiv(B, 2), 128))
    bb = max(128, _round_up(bb, 128))
    if bb >= B:
        bb = B  # tiny batch: one exact block, no ragged tail
    grid = (pl.cdiv(B, bb),)

    # Grid-resident operands prepared once in the wrapper (all tiny).
    w1c = w1.astype(compute_dtype)
    w2c = w2.astype(compute_dtype)
    b1c = b1.reshape(hidden_dim, 1).astype(jnp.float32)
    b2c = b2.reshape(hidden_dim, 1).astype(jnp.float32)
    w3c = w3.reshape(hidden_dim, 1).astype(jnp.float32)   # column for VPU path
    b3s = b3.reshape(1, 1).astype(jnp.float32)

    kernel = functools.partial(fcnet_kernel, compute_dtype=compute_dtype)

    in_specs = [
        pl.BlockSpec((bb, z_dim), lambda i: (i, 0)),               # x tile
        pl.BlockSpec((hidden_dim, z_dim), lambda i: (0, 0)),       # w1
        pl.BlockSpec((hidden_dim, 1), lambda i: (0, 0)),           # b1
        pl.BlockSpec((hidden_dim, hidden_dim), lambda i: (0, 0)),  # w2
        pl.BlockSpec((hidden_dim, 1), lambda i: (0, 0)),           # b2
        pl.BlockSpec((hidden_dim, 1), lambda i: (0, 0)),           # w3 column
        pl.BlockSpec(memory_space=pltpu.MemorySpace.SMEM),         # b3 scalar
    ]
    out_specs = pl.BlockSpec((1, bb), lambda i: (0, i))

    out = pl.pallas_call(
        kernel,
        out_shape=jax.ShapeDtypeStruct((1, B), jnp.float32),
        grid_spec=pltpu.PrefetchScalarGridSpec(
            num_scalar_prefetch=0,
            grid=grid,
            in_specs=in_specs,
            out_specs=out_specs,
        ),
        compiler_params=pltpu.CompilerParams(
            dimension_semantics=("parallel",),   # megacore sharding on v7x
        ),
    )(x, w1c, b1c, w2c, b2c, w3c, b3s)

    return out[0, :].reshape(B, 1)


def init_params(key, z_dim, hidden_dim):
    # Deterministic synthetic init (roughly PyTorch's uniform fan-in scaling);
    # weights stored PyTorch-style as (out_features, in_features).
    ks = jax.random.split(key, 6)

    def u(k, shape, fan_in):
        bound = 1.0 / jnp.sqrt(fan_in)
        return jax.random.uniform(k, shape, jnp.float32, -bound, bound)

    w1 = u(ks[0], (hidden_dim, z_dim), z_dim)
    b1 = u(ks[1], (hidden_dim,), z_dim)
    w2 = u(ks[2], (hidden_dim, hidden_dim), hidden_dim)
    b2 = u(ks[3], (hidden_dim,), hidden_dim)
    w3 = u(ks[4], (1, hidden_dim), hidden_dim)
    b3 = u(ks[5], (1,), hidden_dim)
    return (w1, b1, w2, b2, w3, b3)


def fcnet_ref(x, params):
    w1, b1, w2, b2, w3, b3 = params
    h = jax.nn.relu(x @ w1.T + b1)
    h = jax.nn.relu(h @ w2.T + b2)
    h = jax.nn.relu(h @ w2.T + b2)
    return jax.nn.sigmoid(h @ w3.T + b3)


if __name__ == "__main__":
    key = jax.random.PRNGKey(0)
    k_x, k_p, k_x2 = jax.random.split(key, 3)

    batch, z_dim, hidden_dim = 16, 32, 32
    x = jax.random.normal(k_x, (batch, z_dim), dtype=jnp.float32)
    params = init_params(k_p, z_dim, hidden_dim)
    ref = fcnet_ref(x, params)

    # Exact f32 path, tiny batch -> single exact block.
    out_f32 = jax.block_until_ready(fcnet_forward(x, params, use_bf16=False))
    assert out_f32.shape == (batch, 1)
    assert jnp.allclose(out_f32, ref, atol=1e-5, rtol=1e-5)

    # Fast bf16-MXU path (default).
    out_bf16 = jax.block_until_ready(fcnet_forward(x, params, use_bf16=True))
    assert jnp.allclose(out_bf16, ref, atol=2e-2, rtol=2e-2)

    # Multi-block grid, exact tiling (exercises batch tiling / parallel axis).
    x2 = jax.random.normal(k_x2, (384, z_dim), dtype=jnp.float32)
    ref2 = fcnet_ref(x2, params)
    out2 = jax.block_until_ready(
        fcnet_forward(x2, params, block_b=128, use_bf16=False))
    assert out2.shape == (384, 1)
    assert jnp.allclose(out2, ref2, atol=1e-5, rtol=1e-5)

    # Default block selection -> bb=256, grid=2 with a ragged last block
    # (exercises Pallas OOB-read padding / masked output store).
    out3 = jax.block_until_ready(fcnet_forward(x2, params, use_bf16=False))
    assert out3.shape == (384, 1)
    assert jnp.allclose(out3, ref2, atol=1e-5, rtol=1e-5)

    print("KERNEL_OK")
</pallas_src>

<mosaic_0001>
module attributes {stable_mosaic.version = 11 : i64} {
  func.func @fcnet_kernel(%arg0: i32, %arg1: memref<16x32xf32, #tpu.memory_space<vmem>>, %arg2: memref<32x32xf32, #tpu.memory_space<vmem>>, %arg3: memref<32x1xf32, #tpu.memory_space<vmem>>, %arg4: memref<32x32xf32, #tpu.memory_space<vmem>>, %arg5: memref<32x1xf32, #tpu.memory_space<vmem>>, %arg6: memref<32x1xf32, #tpu.memory_space<vmem>>, %arg7: memref<1x1xf32, #tpu.memory_space<smem>>, %arg8: memref<1x16xf32, #tpu.memory_space<vmem>>) attributes {dimension_semantics = [#tpu.dimension_semantics<parallel>], iteration_bounds = array<i64: 1>, scalar_prefetch = 0 : i64, scratch_operands = 0 : i64, tpu.core_type = #tpu.core_type<tc>, window_params = [{transform_indices = @transform_0, window_bounds = array<i64: 16, 32>}, {pipeline_mode = #tpu.pipeline_mode<synchronous>, transform_indices = @transform_1, window_bounds = array<i64: 32, 32>}, {pipeline_mode = #tpu.pipeline_mode<synchronous>, transform_indices = @transform_2, window_bounds = array<i64: 32, 1>}, {pipeline_mode = #tpu.pipeline_mode<synchronous>, transform_indices = @transform_3, window_bounds = array<i64: 32, 32>}, {pipeline_mode = #tpu.pipeline_mode<synchronous>, transform_indices = @transform_4, window_bounds = array<i64: 32, 1>}, {pipeline_mode = #tpu.pipeline_mode<synchronous>, transform_indices = @transform_5, window_bounds = array<i64: 32, 1>}, {transform_indices = @transform_6, window_bounds = array<i64: 1, 1>}, {transform_indices = @transform_7, window_bounds = array<i64: 1, 16>}]} {
    %c0 = arith.constant 0 : index
    %c0_0 = arith.constant 0 : index
    %0 = vector.load %arg1[%c0, %c0_0] : memref<16x32xf32, #tpu.memory_space<vmem>>, vector<16x32xf32>
    %c0_1 = arith.constant 0 : index
    %c0_2 = arith.constant 0 : index
    %1 = vector.load %arg2[%c0_1, %c0_2] : memref<32x32xf32, #tpu.memory_space<vmem>>, vector<32x32xf32>
    %cst = arith.constant dense<0.000000e+00> : vector<32x16xf32>
    %2 = tpu.matmul %1, %0, %cst {dimension_numbers = #tpu.dot_dimension_numbers<[1], [1], [0], [0], [0, 0, 1, 0], [], []>} : vector<32x32xf32>, vector<16x32xf32>, vector<32x16xf32> -> vector<32x16xf32>
    %c0_3 = arith.constant 0 : index
    %c0_4 = arith.constant 0 : index
    %3 = vector.load %arg3[%c0_3, %c0_4] : memref<32x1xf32, #tpu.memory_space<vmem>>, vector<32x1xf32>
    %4 = vector.broadcast %3 : vector<32x1xf32> to vector<32x16xf32>
    %5 = arith.addf %2, %4 : vector<32x16xf32>
    %cst_5 = arith.constant 0.000000e+00 : f32
    %6 = vector.broadcast %cst_5 : f32 to vector<32x16xf32>
    %7 = arith.maximumf %5, %6 : vector<32x16xf32>
    %c0_6 = arith.constant 0 : index
    %c0_7 = arith.constant 0 : index
    %8 = vector.load %arg4[%c0_6, %c0_7] : memref<32x32xf32, #tpu.memory_space<vmem>>, vector<32x32xf32>
    %cst_8 = arith.constant dense<0.000000e+00> : vector<32x16xf32>
    %9 = tpu.matmul %8, %7, %cst_8 {dimension_numbers = #tpu.dot_dimension_numbers<[1], [0], [0], [1], [0, 0, 1, 1], [], []>} : vector<32x32xf32>, vector<32x16xf32>, vector<32x16xf32> -> vector<32x16xf32>
    %c0_9 = arith.constant 0 : index
    %c0_10 = arith.constant 0 : index
    %10 = vector.load %arg5[%c0_9, %c0_10] : memref<32x1xf32, #tpu.memory_space<vmem>>, vector<32x1xf32>
    %11 = vector.broadcast %10 : vector<32x1xf32> to vector<32x16xf32>
    %12 = arith.addf %9, %11 : vector<32x16xf32>
    %cst_11 = arith.constant 0.000000e+00 : f32
    %13 = vector.broadcast %cst_11 : f32 to vector<32x16xf32>
    %14 = arith.maximumf %12, %13 : vector<32x16xf32>
    %c0_12 = arith.constant 0 : index
    %c0_13 = arith.constant 0 : index
    %15 = vector.load %arg4[%c0_12, %c0_13] : memref<32x32xf32, #tpu.memory_space<vmem>>, vector<32x32xf32>
    %cst_14 = arith.constant dense<0.000000e+00> : vector<32x16xf32>
    %16 = tpu.matmul %15, %14, %cst_14 {dimension_numbers = #tpu.dot_dimension_numbers<[1], [0], [0], [1], [0, 0, 1, 1], [], []>} : vector<32x32xf32>, vector<32x16xf32>, vector<32x16xf32> -> vector<32x16xf32>
    %c0_15 = arith.constant 0 : index
    %c0_16 = arith.constant 0 : index
    %17 = vector.load %arg5[%c0_15, %c0_16] : memref<32x1xf32, #tpu.memory_space<vmem>>, vector<32x1xf32>
    %18 = vector.broadcast %17 : vector<32x1xf32> to vector<32x16xf32>
    %19 = arith.addf %16, %18 : vector<32x16xf32>
    %cst_17 = arith.constant 0.000000e+00 : f32
    %20 = vector.broadcast %cst_17 : f32 to vector<32x16xf32>
    %21 = arith.maximumf %19, %20 : vector<32x16xf32>
    %c0_18 = arith.constant 0 : index
    %c0_19 = arith.constant 0 : index
    %22 = vector.load %arg6[%c0_18, %c0_19] : memref<32x1xf32, #tpu.memory_space<vmem>>, vector<32x1xf32>
    %23 = vector.broadcast %22 : vector<32x1xf32> to vector<32x16xf32>
    %24 = arith.mulf %23, %21 : vector<32x16xf32>
    %cst_20 = arith.constant dense<0.000000e+00> : vector<16xf32>
    %25 = vector.multi_reduction <add>, %24, %cst_20 [0] : vector<32x16xf32> to vector<16xf32>
    %26 = vector.shape_cast %25 : vector<16xf32> to vector<1x16xf32>
    %c0_21 = arith.constant 0 : index
    %c0_22 = arith.constant 0 : index
    %27 = memref.load %arg7[%c0_21, %c0_22] : memref<1x1xf32, #tpu.memory_space<smem>>
    %28 = vector.broadcast %27 : f32 to vector<1x16xf32>
    %29 = arith.addf %26, %28 : vector<1x16xf32>
    %30 = arith.negf %29 : vector<1x16xf32>
    %31 = math.exp %30 : vector<1x16xf32>
    %cst_23 = arith.constant 1.000000e+00 : f32
    %32 = vector.broadcast %cst_23 : f32 to vector<1x16xf32>
    %33 = arith.addf %32, %31 : vector<1x16xf32>
    %34 = arith.divf %32, %33 : vector<1x16xf32>
    %c0_24 = arith.constant 0 : index
    %c0_25 = arith.constant 0 : index
    %35 = vector.load %arg8[%c0_24, %c0_25] : memref<1x16xf32, #tpu.memory_space<vmem>>, vector<1x16xf32>
    tpu.vector_store %arg8[%c0_24, %c0_25], %34 {strides = array<i32>} : memref<1x16xf32, #tpu.memory_space<vmem>>, vector<1x16xf32>,
    return
  }
  func.func @transform_0(%arg0: i32) -> (i32, i32) {
    %c0_i32 = arith.constant 0 : i32
    %c0_i32_0 = arith.constant 0 : i32
    return %arg0, %c0_i32 : i32, i32
  }
  func.func @transform_1(%arg0: i32) -> (i32, i32) {
    %c0_i32 = arith.constant 0 : i32
    %c0_i32_0 = arith.constant 0 : i32
    %c0_i32_1 = arith.constant 0 : i32
    return %c0_i32, %c0_i32_0 : i32, i32
  }
  func.func @transform_2(%arg0: i32) -> (i32, i32) {
    %c0_i32 = arith.constant 0 : i32
    %c0_i32_0 = arith.constant 0 : i32
    %c0_i32_1 = arith.constant 0 : i32
    return %c0_i32, %c0_i32_0 : i32, i32
  }
  func.func @transform_3(%arg0: i32) -> (i32, i32) {
    %c0_i32 = arith.constant 0 : i32
    %c0_i32_0 = arith.constant 0 : i32
    %c0_i32_1 = arith.constant 0 : i32
    return %c0_i32, %c0_i32_0 : i32, i32
  }
  func.func @transform_4(%arg0: i32) -> (i32, i32) {
    %c0_i32 = arith.constant 0 : i32
    %c0_i32_0 = arith.constant 0 : i32
    %c0_i32_1 = arith.constant 0 : i32
    return %c0_i32, %c0_i32_0 : i32, i32
  }
  func.func @transform_5(%arg0: i32) -> (i32, i32) {
    %c0_i32 = arith.constant 0 : i32
    %c0_i32_0 = arith.constant 0 : i32
    %c0_i32_1 = arith.constant 0 : i32
    return %c0_i32, %c0_i32_0 : i32, i32
  }
  func.func @transform_6(%arg0: i32) -> (i32, i32) {
    %c0_i32 = arith.constant 0 : i32
    %c0_i32_0 = arith.constant 0 : i32
    %c0_i32_1 = arith.constant 0 : i32
    return %c0_i32, %c0_i32_0 : i32, i32
  }
  func.func @transform_7(%arg0: i32) -> (i32, i32) {
    %c0_i32 = arith.constant 0 : i32
    %c0_i32_0 = arith.constant 0 : i32
    return %c0_i32, %arg0 : i32, i32
  }
}

</mosaic_0001>

<llo_original>
// kernel: tpu_custom_call.1
$region0: #{tpu_custom_call.1}
  #allocation0 [shape = 'u32[]', space=smem, size = 0x4, offset = 0x4, fixed_abs, tag = 'smem constant byte address 0x4 - core index']
  #allocation1 [shape = 'u32[72,128]{1,0:T(1,128)}', space=vmem, size = 0x9000, scoped, tag = 'internal scratch']
  #allocation2 [shape = 'f32[1,1]{1,0:T(1,128)S(6)}', space=smem, size = 0x200, scoped, tag = 'scoped memory for tpu_custom_call.1']
  %s0 = inlined_call_operand.vmem [shape: f32[16,32], index: 0, kind: input, shape index: {}]
  %s1 = inlined_call_operand.vmem [shape: f32[32,32], index: 1, kind: input, shape index: {}]
  %s2 = inlined_call_operand.vmem [shape: f32[32,1], index: 2, kind: input, shape index: {}]
  %s3 = inlined_call_operand.vmem [shape: f32[32,32], index: 3, kind: input, shape index: {}]
  %s4 = inlined_call_operand.vmem [shape: f32[32,1], index: 4, kind: input, shape index: {}]
  %s5 = inlined_call_operand.vmem [shape: f32[32,1], index: 5, kind: input, shape index: {}]
  %s6 = inlined_call_operand.<no memory space> [shape: f32[1,1], index: 6, kind: input, shape index: {}]
  %s7 = inlined_call_operand.hbm [shape: f32[1,16], index: 7, kind: output, shape index: {}]
  %s8 = sld [smem:[#allocation0]]
  $region38: #{tpu_custom_call.1} parent=0
    _
  %s10 = ssub.s32 1, %s8
  %s11 = scalar_select 0, %s10, %s8
  %12 = sst [smem:[#allocation2]] %s6
  $region1: #{tpu_custom_call.1} parent=0
    #allocation3 [shape = 'u8[512]{0}', space=vmem, size = 0x400, scoped, tag = 'output window, operand 0, single buffered']
    #allocation4 [shape = 's32[1]{0}', space=sflag, size = 0x4, scoped, tag = 'scoped memory for tpu_custom_call.1']
    %13 = vsyncpa [#allocation4], 0
    // Predicated region
    $region2: #{tpu_custom_call.1} parent=1 // pred_check
      _
    $region3: #{tpu_custom_call.1} parent=1 // pred_check_branch
      %15 = sbr.rel (0) target = $region5
    $region4: #{tpu_custom_call.1} parent=1 // pred_region
      _
    $region5: #{tpu_custom_call.1} parent=1 // pred_fallthru
      _
    // Predicated region
    $region6: #{tpu_custom_call.1} parent=1 // pred_check
      _
    $region7: #{tpu_custom_call.1} parent=1 // pred_check_branch
      %17 = sbr.rel (0) target = $region9
    $region8: #{tpu_custom_call.1} parent=1 // pred_region
      _
    $region9: #{tpu_custom_call.1} parent=1 // pred_fallthru
      _
    // Predicated region
    $region10: #{tpu_custom_call.1} parent=1 // pred_check
      _
    $region11: #{tpu_custom_call.1} parent=1 // pred_check_branch
      %19 = sbr.rel (0) target = $region13
    $region12: #{tpu_custom_call.1} parent=1 // pred_region
      _
    $region13: #{tpu_custom_call.1} parent=1 // pred_fallthru
      _
    // Predicated region
    $region14: #{tpu_custom_call.1} parent=1 // pred_check
      _
    $region15: #{tpu_custom_call.1} parent=1 // pred_check_branch
      %21 = sbr.rel (0) target = $region17
    $region16: #{tpu_custom_call.1} parent=1 // pred_region
      _
    $region17: #{tpu_custom_call.1} parent=1 // pred_fallthru
      _
    // Predicated region
    $region18: #{tpu_custom_call.1} parent=1 // pred_check
      _
    $region19: #{tpu_custom_call.1} parent=1 // pred_check_branch
      %23 = sbr.rel (0) target = $region21
    $region20: #{tpu_custom_call.1} parent=1 // pred_region
      _
    $region21: #{tpu_custom_call.1} parent=1 // pred_fallthru
      _
    // Predicated region
    $region22: #{tpu_custom_call.1} parent=1 // pred_check
      _
    $region23: #{tpu_custom_call.1} parent=1 // pred_check_branch
      %25 = sbr.rel (0) target = $region25
    $region24: #{tpu_custom_call.1} parent=1 // pred_region
      _
    $region25: #{tpu_custom_call.1} parent=1 // pred_fallthru
      _
    // Predicated region
    $region26: #{tpu_custom_call.1} parent=1 // pred_check
      _
    $region27: #{tpu_custom_call.1} parent=1 // pred_check_branch
      %27 = sbr.rel (0) target = $region29
    $region28: #{tpu_custom_call.1} parent=1 // pred_region
      _
    $region29: #{tpu_custom_call.1} parent=1 // pred_fallthru
      _
    %v28 = vld [vmem:[%s0] sm:$0xff]
    %v29 = vld [vmem:[%s0 + $0x8] sm:$0xff]
    %v30 = vld [vmem:[%s1] sm:$0xff]
    %v31 = vld [vmem:[%s1 + $0x8] sm:$0xff]
    %v32 = vld [vmem:[%s1 + $0x10] sm:$0xff]
    %v33 = vld [vmem:[%s1 + $0x18] sm:$0xff]
    %v34 = vld [vmem:[%s2] sm:$0xff]
    %v35 = vld [vmem:[%s2 + $0x8] sm:$0xff]
    %v36 = vld [vmem:[%s2 + $0x10] sm:$0xff]
    %v37 = vld [vmem:[%s2 + $0x18] sm:$0xff]
    %39 = vset.pattern.permute.xlu0 0
    %40 = vperm.xlu0 %39, %v34
    %v41 = vpop.permute.xlu0 %40
    %44 = vset.pattern.permute.xlu0 0
    %45 = vperm.xlu0 %44, %v35
    %v46 = vpop.permute.xlu0 %45
    %49 = vset.pattern.permute.xlu0 0
    %50 = vperm.xlu0 %49, %v36
    %v51 = vpop.permute.xlu0 %50
    %54 = vset.pattern.permute.xlu0 0
    %55 = vperm.xlu0 %54, %v37
    %v56 = vpop.permute.xlu0 %55
    %vm58 = vcmask 261120
    %v60 = vsel %vm58, %v30, 0
    %v63 = vsel %vm58, %v31, 0
    %v66 = vsel %vm58, %v32, 0
    %v69 = vsel %vm58, %v33, 0
    %v72 = vsel %vm58, %v28, 0
    %v75 = vsel %vm58, %v29, 0
    %77 = vmatpush.xpose.msra.mxu0 0.0
    %78 = vmatpush.xpose.msra.mxu0 0.0
    %79 = vmatpush.xpose.msra.mxu0 0.0
    %80 = vmatpush.xpose.msra.mxu0 0.0
    %81 = vmatpush.xpose.msra.mxu0 0.0
    %82 = vmatpush.xpose.msra.mxu0 0.0
    %83 = vmatpush.xpose.msra.mxu0 0.0
    %84 = vmatpush.xpose.msra.mxu0 0.0
    %85 = vmatpush.xpose.msra.mxu0 0.0
    %86 = vmatpush.xpose.msra.mxu0 0.0
    %87 = vmatpush.xpose.msra.mxu0 0.0
    %88 = vmatpush.xpose.msra.mxu0 0.0
    %89 = vmatpush.xpose.msra.mxu0 0.0
    %90 = vmatpush.xpose.msra.mxu0 0.0
    %91 = vmatpush.xpose.msra.mxu0 %v75
    %92 = vmatpush.xpose.msra.mxu0 %v72
    %93 = vmatmul.f32.gmra.mxu0 %v60
    %v94 = vpop.f32.mrf.mxu0
    %v95 = vadd.f32 %v41, %v94
    %96 = vmatmul.f32.gmra.mxu0 %v63
    %v97 = vpop.f32.mrf.mxu0
    %v98 = vadd.f32 %v46, %v97
    %99 = vmatmul.f32.gmra.mxu0 %v66
    %v100 = vpop.f32.mrf.mxu0
    %v101 = vadd.f32 %v51, %v100
    %102 = vmatmul.f32.gmra.mxu0 %v69
    %v103 = vpop.f32.mrf.mxu0
    %v104 = vadd.f32 %v56, %v103
    %105 = vdwg.mxu0
    %v106 = vmax.f32 %v95, 0.0
    %v107 = vmax.f32 %v98, 0.0
    %v108 = vmax.f32 %v101, 0.0
    %v109 = vmax.f32 %v104, 0.0
    %v110 = vld [vmem:[%s3] sm:$0xff]
    %v111 = vld [vmem:[%s3 + $0x8] sm:$0xff]
    %v112 = vld [vmem:[%s3 + $0x10] sm:$0xff]
    %v113 = vld [vmem:[%s3 + $0x18] sm:$0xff]
    %v114 = vld [vmem:[%s4] sm:$0xff]
    %v115 = vld [vmem:[%s4 + $0x8] sm:$0xff]
    %v116 = vld [vmem:[%s4 + $0x10] sm:$0xff]
    %v117 = vld [vmem:[%s4 + $0x18] sm:$0xff]
    %119 = vset.pattern.permute.xlu0 0
    %120 = vperm.xlu0 %119, %v114
    %v121 = vpop.permute.xlu0 %120
    %124 = vset.pattern.permute.xlu0 0
    %125 = vperm.xlu0 %124, %v115
    %v126 = vpop.permute.xlu0 %125
    %129 = vset.pattern.permute.xlu0 0
    %130 = vperm.xlu0 %129, %v116
    %v131 = vpop.permute.xlu0 %130
    %134 = vset.pattern.permute.xlu0 0
    %135 = vperm.xlu0 %134, %v117
    %v136 = vpop.permute.xlu0 %135
    %v139 = vsel %vm58, %v110, 0
    %v142 = vsel %vm58, %v111, 0
    %v145 = vsel %vm58, %v112, 0
    %v148 = vsel %vm58, %v113, 0
    %150 = vmatpush.msra.mxu0 0.0
    %151 = vmatpush.msra.mxu0 0.0
    %152 = vmatpush.msra.mxu0 0.0
    %153 = vmatpush.msra.mxu0 0.0
    %154 = vmatpush.msra.mxu0 0.0
    %155 = vmatpush.msra.mxu0 0.0
    %156 = vmatpush.msra.mxu0 0.0
    %157 = vmatpush.msra.mxu0 0.0
    %158 = vmatpush.msra.mxu0 0.0
    %159 = vmatpush.msra.mxu0 0.0
    %160 = vmatpush.msra.mxu0 0.0
    %161 = vmatpush.msra.mxu0 0.0
    %162 = vmatpush.msra.mxu0 %v109
    %163 = vmatpush.msra.mxu0 %v108
    %164 = vmatpush.msra.mxu0 %v107
    %165 = vmatpush.msra.mxu0 %v106
    %166 = vmatmul.f32.gmra.mxu0 %v139
    %v167 = vpop.f32.mrf.mxu0
    %v168 = vadd.f32 %v121, %v167
    %169 = vmatmul.f32.gmra.mxu0 %v142
    %v170 = vpop.f32.mrf.mxu0
    %v171 = vadd.f32 %v126, %v170
    %172 = vmatmul.f32.gmra.mxu0 %v145
    %v173 = vpop.f32.mrf.mxu0
    %v174 = vadd.f32 %v131, %v173
    %175 = vmatmul.f32.gmra.mxu0 %v148
    %v176 = vpop.f32.mrf.mxu0
    %v177 = vadd.f32 %v136, %v176
    %178 = vdwg.mxu0
    %v179 = vmax.f32 %v168, 0.0
    %v180 = vmax.f32 %v171, 0.0
    %v181 = vmax.f32 %v174, 0.0
    %v182 = vmax.f32 %v177, 0.0
    %183 = vmatpush.msra.mxu0 0.0
    %184 = vmatpush.msra.mxu0 0.0
    %185 = vmatpush.msra.mxu0 0.0
    %186 = vmatpush.msra.mxu0 0.0
    %187 = vmatpush.msra.mxu0 0.0
    %188 = vmatpush.msra.mxu0 0.0
    %189 = vmatpush.msra.mxu0 0.0
    %190 = vmatpush.msra.mxu0 0.0
    %191 = vmatpush.msra.mxu0 0.0
    %192 = vmatpush.msra.mxu0 0.0
    %193 = vmatpush.msra.mxu0 0.0
    %194 = vmatpush.msra.mxu0 0.0
    %195 = vmatpush.msra.mxu0 %v182
    %196 = vmatpush.msra.mxu0 %v181
    %197 = vmatpush.msra.mxu0 %v180
    %198 = vmatpush.msra.mxu0 %v179
    %199 = vmatmul.f32.gmra.mxu0 %v139
    %v200 = vpop.f32.mrf.mxu0
    %v201 = vadd.f32 %v121, %v200
    %202 = vmatmul.f32.gmra.mxu0 %v142
    %v203 = vpop.f32.mrf.mxu0
    %v204 = vadd.f32 %v126, %v203
    %205 = vmatmul.f32.gmra.mxu0 %v145
    %v206 = vpop.f32.mrf.mxu0
    %v207 = vadd.f32 %v131, %v206
    %208 = vmatmul.f32.gmra.mxu0 %v148
    %v209 = vpop.f32.mrf.mxu0
    %v210 = vadd.f32 %v136, %v209
    %211 = vdwg.mxu0
    %v212 = vmax.f32 %v201, 0.0
    %v213 = vmax.f32 %v204, 0.0
    %v214 = vmax.f32 %v207, 0.0
    %v215 = vmax.f32 %v210, 0.0
    %v216 = vld [vmem:[%s5] sm:$0xff]
    %v217 = vld [vmem:[%s5 + $0x8] sm:$0xff]
    %v218 = vld [vmem:[%s5 + $0x10] sm:$0xff]
    %v219 = vld [vmem:[%s5 + $0x18] sm:$0xff]
    %221 = vset.pattern.permute.xlu0 0
    %222 = vperm.xlu0 %221, %v216
    %v223 = vpop.permute.xlu0 %222
    %226 = vset.pattern.permute.xlu0 0
    %227 = vperm.xlu0 %226, %v217
    %v228 = vpop.permute.xlu0 %227
    %231 = vset.pattern.permute.xlu0 0
    %232 = vperm.xlu0 %231, %v218
    %v233 = vpop.permute.xlu0 %232
    %236 = vset.pattern.permute.xlu0 0
    %237 = vperm.xlu0 %236, %v219
    %v238 = vpop.permute.xlu0 %237
    %v240 = vmul.f32 %v223, %v212
    %v241 = vmul.f32 %v228, %v213
    %v242 = vmul.f32 %v233, %v214
    %v243 = vmul.f32 %v238, %v215
    %vm244 = vcmask 130048
    %v245 = vsel %vm244, %v240, 0.0
    %v246 = vsel %vm244, %v241, 0.0
    %v247 = vadd.f32 %v245, %v246
    %v248 = vsel %vm244, %v242, 0.0
    %v249 = vadd.f32 %v247, %v248
    %v250 = vsel %vm244, %v243, 0.0
    %v251 = vadd.f32 %v249, %v250
    %v252 = vrot.slane %v251, 4
    %v253 = vadd.f32 %v251, %v252
    %v254 = vrot.slane %v253, 2
    %v255 = vadd.f32 %v253, %v254
    %v256 = vrot.slane %v255, 1
    %v257 = vadd.f32 %v255, %v256
    %s258 = sld [smem:[#allocation2]]
    %v259 = vstv %s258
    %v260 = vadd.f32 %v257, %v259
    %v261 = vxor.u32 %v260, 2147483648
    %v262 = vmul.f32 %v261, 1.442695
    %v263 = vpow.pop %v262
    %v264 = vadd.f32 %v263, 1.0
    %v265 = vrcp.pop %v264
    %v266 = vmul.f32 %v264, %v265
    %v267 = vsub.f32 1.0, %v266
    %v268 = vmul.f32 %v265, %v267
    %v269 = vadd.f32 %v265, %v268
    %vm270 = vweird.f32 %v264
    %vm271 = vweird.f32 %v265
    %vm272 = vmor %vm270, %vm271
    %v273 = vsel %vm272, %v265, %v269
    %v274 = vand.u32 2147483647, %v264
    %vm275 = vcmp.eq.f32.partialorder %v274, 8.507059e+37
    %v276 = vand.u32 %v264, 2147483648
    %v277 = vor.u32 1.1754944e-38, %v276
    %v278 = vsel %vm275, %v277, %v273
    %v279 = vmul.f32 1.0, %v278
    %vm280 = vcmask 122880
    %281 = vst.msk [vmem:[#allocation3] sm:$0x1] %vm280, %v279
    // Predicated region
    $region30: #{tpu_custom_call.1} parent=1 // pred_check
      _
    $region31: #{tpu_custom_call.1} parent=1 // pred_check_branch
      %283 = sbr.rel (0) target = $region33
    $region32: #{tpu_custom_call.1} parent=1 // pred_region
      %285 = vsyncadd [#allocation4], 0
      %s287 = sshll.u32 [#allocation3], 4
      %s288 = int_to_ptr.vmem [resolvable:$true] %s287
      %s289 = sshll.u32 %s7, 4
      %s290 = int_to_ptr.hbm [resolvable:$true] %s289
      %292 = dma.vmem_to_hbm [thread:$0]  %s288, 16, %s290, [#allocation4]
    $region33: #{tpu_custom_call.1} parent=1 // pred_fallthru
      _
    // Predicated region
    $region34: #{tpu_custom_call.1} parent=1 // pred_check
      _
    $region35: #{tpu_custom_call.1} parent=1 // pred_check_branch
      %294 = sbr.rel (0) target = $region37
    $region36: #{tpu_custom_call.1} parent=1 // pred_region
      %296 = dma.done [#allocation4], 16
    $region37: #{tpu_custom_call.1} parent=1 // pred_fallthru
      _
    %297 = vsyncpa [#allocation4], 1

</llo_original>
